<compile_context>
chip_gen: v6e
topology: v6e:2x2x1
jax: 0.10.0
libtpu: 0.0.40
codegen_flags: <defaults>
</compile_context>

<pallas_src>
import functools

import jax
import jax.numpy as jnp
from jax.experimental import pallas as pl
from jax.experimental.pallas import tpu as pltpu


BN_EPS = 1e-5


def _round_up(x, m):
    return (x + m - 1) // m * m


# ----------------------------- Pallas kernel --------------------------------

def fused_mlp_kernel(x_ref, *refs, layer_meta):
    """Whole MLP fused: for each layer  h = [ReLU](h @ W + b) [+ h]  kept in VMEM/vregs."""
    o_ref = refs[-1]
    param_refs = refs[:-1]
    h = x_ref[...].astype(jnp.float32)
    for li, (residual, activate) in enumerate(layer_meta):
        w = param_refs[2 * li][...]
        b = param_refs[2 * li + 1][...]
        y = jnp.dot(h, w, preferred_element_type=jnp.float32) + b
        if activate:
            y = jnp.maximum(y, 0.0)
        # TODO(synk): dropout omitted (identity in eval mode; training dropout is stochastic).
        if residual:
            y = y + h
        h = y
    o_ref[...] = h.astype(o_ref.dtype)


# ------------------------------ wrapper --------------------------------------

def multilayer_feed_forward(x, layers_padded, final_out_dim):
    """Forward pass using one fused Pallas kernel over all layers.

    layers_padded: list of dicts with 'w' (Kp, Np), 'b' (1, Np) padded to 128-multiples,
                   plus 'residual' / 'activate' flags (derived from original dims).
    final_out_dim: un-padded output feature count (for the final slice).
    """
    B, D = x.shape
    Dp = layers_padded[0]["w"].shape[0]
    Np_last = layers_padded[-1]["w"].shape[1]

    # Row tiling: pad batch to the sublane multiple, cap the tile so very large batches
    # produce multiple "parallel" grid steps (megacore sharding), no divisibility asserts.
    B8 = _round_up(B, 8)
    tm = min(256, B8)
    Bp = _round_up(B8, tm)

    xp = jnp.zeros((Bp, Dp), x.dtype).at[:B, :D].set(x)

    meta = tuple((l["residual"], l["activate"]) for l in layers_padded)
    kernel = functools.partial(fused_mlp_kernel, layer_meta=meta)

    in_specs = [pl.BlockSpec((tm, Dp), lambda i: (i, 0))]
    args = [xp]
    flops = 0
    bytes_accessed = xp.size * 4 + Bp * Np_last * 4
    for l in layers_padded:
        Kp, Np = l["w"].shape
        in_specs.append(pl.BlockSpec((Kp, Np), lambda i: (0, 0)))
        in_specs.append(pl.BlockSpec((1, Np), lambda i: (0, 0)))
        args.extend([l["w"], l["b"]])
        flops += 2 * Bp * Kp * Np
        bytes_accessed += (Kp * Np + Np) * 4

    out = pl.pallas_call(
        kernel,
        out_shape=jax.ShapeDtypeStruct((Bp, Np_last), x.dtype),
        grid=(Bp // tm,),
        in_specs=in_specs,
        out_specs=pl.BlockSpec((tm, Np_last), lambda i: (i, 0)),
        compiler_params=pltpu.CompilerParams(dimension_semantics=("parallel",)),
        cost_estimate=pl.CostEstimate(
            flops=flops, transcendentals=0, bytes_accessed=bytes_accessed),
    )(*args)

    return out[:B, :final_out_dim]


# ------------------------- parameter construction ---------------------------

def init_ffl_params(key, in_dim, out_dim):
    """nn.Linear + BatchNorm1d(eval) with the BN affine folded into the weights."""
    k_w, k_b, k_g, k_be, k_m, k_v = jax.random.split(key, 6)
    bound = 1.0 / jnp.sqrt(in_dim)
    w = jax.random.uniform(k_w, (in_dim, out_dim), jnp.float32, -bound, bound)
    b = jax.random.uniform(k_b, (1, out_dim), jnp.float32, -bound, bound)
    gamma = jax.random.uniform(k_g, (1, out_dim), jnp.float32, 0.5, 1.5)
    beta = jax.random.uniform(k_be, (1, out_dim), jnp.float32, -0.5, 0.5)
    running_mean = jax.random.uniform(k_m, (1, out_dim), jnp.float32, -0.5, 0.5)
    running_var = jax.random.uniform(k_v, (1, out_dim), jnp.float32, 0.5, 1.5)
    scale = gamma / jnp.sqrt(running_var + BN_EPS)
    shift = beta - running_mean * scale
    w_eff = w * scale                 # per-output-channel scale folded into columns
    b_eff = b * scale + shift
    return dict(w=w_eff, b=b_eff, residual=(in_dim == out_dim), activate=True,
                in_dim=in_dim, out_dim=out_dim)


def init_linear_params(key, in_dim, out_dim):
    k_w, k_b = jax.random.split(key)
    bound = 1.0 / jnp.sqrt(in_dim)
    w = jax.random.uniform(k_w, (in_dim, out_dim), jnp.float32, -bound, bound)
    b = jax.random.uniform(k_b, (1, out_dim), jnp.float32, -bound, bound)
    return dict(w=w, b=b, residual=False, activate=False,
                in_dim=in_dim, out_dim=out_dim)


def build_multilayer_params(key, n_layer, input_dim, hidden_size, output_dim,
                            last_no_activate=False):
    keys = jax.random.split(key, n_layer)
    layers = [init_ffl_params(keys[0], input_dim, hidden_size)]
    for i in range(n_layer - 2):
        layers.append(init_ffl_params(keys[1 + i], hidden_size, hidden_size))
    if last_no_activate:
        layers.append(init_linear_params(keys[-1], hidden_size, output_dim))
    else:
        layers.append(init_ffl_params(keys[-1], hidden_size, output_dim))
    return layers


def pad_layer_params(p):
    """Zero-pad feature dims to multiples of 128 so every lane/MXU tile is dense.

    Zero padding is exact: padded weight rows/cols and bias lanes are 0, ReLU(0)=0,
    residual adds 0, and next-layer padded weight rows are 0, so padded lanes never
    contaminate real outputs.
    """
    Kp = _round_up(p["in_dim"], 128)
    Np = _round_up(p["out_dim"], 128)
    wp = jnp.zeros((Kp, Np), jnp.float32).at[:p["in_dim"], :p["out_dim"]].set(p["w"])
    bp = jnp.zeros((1, Np), jnp.float32).at[:, :p["out_dim"]].set(p["b"])
    return dict(w=wp, b=bp, residual=p["residual"], activate=p["activate"],
                in_dim=p["in_dim"], out_dim=p["out_dim"])


# --------------------------- pure-JAX reference ------------------------------

def reference_forward(x, layers):
    for p in layers:
        y = x @ p["w"] + p["b"]
        if p["activate"]:
            y = jnp.maximum(y, 0.0)
        if p["residual"]:
            y = x + y
        x = y
    return x


# --------------------------------- main --------------------------------------

if __name__ == "__main__":
    # Module config: MultiLayerFeedForwardLayer(n_layer=3, input_dim=32,
    #   hidden_size=64, output_dim=16, dropout=0.1, activator=ReLU())
    n_layer, input_dim, hidden_size, output_dim = 3, 32, 64, 16
    batch = 8

    key = jax.random.PRNGKey(0)
    k_x, k_p = jax.random.split(key)
    x = jax.random.normal(k_x, (batch, input_dim), jnp.float32)

    layers = build_multilayer_params(k_p, n_layer, input_dim, hidden_size,
                                     output_dim, last_no_activate=False)
    layers_padded = [pad_layer_params(p) for p in layers]

    out = multilayer_feed_forward(x, layers_padded, final_out_dim=output_dim)
    out = jax.block_until_ready(out)

    ref = reference_forward(x, layers)
    assert out.shape == (batch, output_dim)
    assert jnp.allclose(out, ref, rtol=1e-5, atol=1e-5), "mismatch vs reference"

    print("KERNEL_OK")
</pallas_src>

<mosaic_0001>
module attributes {stable_mosaic.version = 11 : i64} {
  func.func @fused_mlp_kernel(%arg0: i32, %arg1: memref<8x128xf32, #tpu.memory_space<vmem>>, %arg2: memref<128x128xf32, #tpu.memory_space<vmem>>, %arg3: memref<1x128xf32, #tpu.memory_space<vmem>>, %arg4: memref<128x128xf32, #tpu.memory_space<vmem>>, %arg5: memref<1x128xf32, #tpu.memory_space<vmem>>, %arg6: memref<128x128xf32, #tpu.memory_space<vmem>>, %arg7: memref<1x128xf32, #tpu.memory_space<vmem>>, %arg8: memref<8x128xf32, #tpu.memory_space<vmem>>) attributes {dimension_semantics = [#tpu.dimension_semantics<parallel>], iteration_bounds = array<i64: 1>, scalar_prefetch = 0 : i64, scratch_operands = 0 : i64, tpu.core_type = #tpu.core_type<tc>, window_params = [{transform_indices = @transform_0, window_bounds = array<i64: 8, 128>}, {pipeline_mode = #tpu.pipeline_mode<synchronous>, transform_indices = @transform_1, window_bounds = array<i64: 128, 128>}, {pipeline_mode = #tpu.pipeline_mode<synchronous>, transform_indices = @transform_2, window_bounds = array<i64: 1, 128>}, {pipeline_mode = #tpu.pipeline_mode<synchronous>, transform_indices = @transform_3, window_bounds = array<i64: 128, 128>}, {pipeline_mode = #tpu.pipeline_mode<synchronous>, transform_indices = @transform_4, window_bounds = array<i64: 1, 128>}, {pipeline_mode = #tpu.pipeline_mode<synchronous>, transform_indices = @transform_5, window_bounds = array<i64: 128, 128>}, {pipeline_mode = #tpu.pipeline_mode<synchronous>, transform_indices = @transform_6, window_bounds = array<i64: 1, 128>}, {transform_indices = @transform_7, window_bounds = array<i64: 8, 128>}]} {
    %c0 = arith.constant 0 : index
    %c0_0 = arith.constant 0 : index
    %0 = vector.load %arg1[%c0, %c0_0] : memref<8x128xf32, #tpu.memory_space<vmem>>, vector<8x128xf32>
    %c0_1 = arith.constant 0 : index
    %c0_2 = arith.constant 0 : index
    %1 = vector.load %arg2[%c0_1, %c0_2] : memref<128x128xf32, #tpu.memory_space<vmem>>, vector<128x128xf32>
    %c0_3 = arith.constant 0 : index
    %c0_4 = arith.constant 0 : index
    %2 = vector.load %arg3[%c0_3, %c0_4] : memref<1x128xf32, #tpu.memory_space<vmem>>, vector<1x128xf32>
    %cst = arith.constant dense<0.000000e+00> : vector<8x128xf32>
    %3 = tpu.matmul %0, %1, %cst {dimension_numbers = #tpu.dot_dimension_numbers<[1], [0], [0], [1], [0, 0, 1, 1], [], []>} : vector<8x128xf32>, vector<128x128xf32>, vector<8x128xf32> -> vector<8x128xf32>
    %4 = vector.broadcast %2 : vector<1x128xf32> to vector<8x128xf32>
    %5 = arith.addf %3, %4 : vector<8x128xf32>
    %cst_5 = arith.constant 0.000000e+00 : f32
    %6 = vector.broadcast %cst_5 : f32 to vector<8x128xf32>
    %7 = arith.maximumf %5, %6 : vector<8x128xf32>
    %c0_6 = arith.constant 0 : index
    %c0_7 = arith.constant 0 : index
    %8 = vector.load %arg4[%c0_6, %c0_7] : memref<128x128xf32, #tpu.memory_space<vmem>>, vector<128x128xf32>
    %c0_8 = arith.constant 0 : index
    %c0_9 = arith.constant 0 : index
    %9 = vector.load %arg5[%c0_8, %c0_9] : memref<1x128xf32, #tpu.memory_space<vmem>>, vector<1x128xf32>
    %cst_10 = arith.constant dense<0.000000e+00> : vector<8x128xf32>
    %10 = tpu.matmul %7, %8, %cst_10 {dimension_numbers = #tpu.dot_dimension_numbers<[1], [0], [0], [1], [0, 0, 1, 1], [], []>} : vector<8x128xf32>, vector<128x128xf32>, vector<8x128xf32> -> vector<8x128xf32>
    %11 = vector.broadcast %9 : vector<1x128xf32> to vector<8x128xf32>
    %12 = arith.addf %10, %11 : vector<8x128xf32>
    %cst_11 = arith.constant 0.000000e+00 : f32
    %13 = vector.broadcast %cst_11 : f32 to vector<8x128xf32>
    %14 = arith.maximumf %12, %13 : vector<8x128xf32>
    %15 = arith.addf %14, %7 : vector<8x128xf32>
    %c0_12 = arith.constant 0 : index
    %c0_13 = arith.constant 0 : index
    %16 = vector.load %arg6[%c0_12, %c0_13] : memref<128x128xf32, #tpu.memory_space<vmem>>, vector<128x128xf32>
    %c0_14 = arith.constant 0 : index
    %c0_15 = arith.constant 0 : index
    %17 = vector.load %arg7[%c0_14, %c0_15] : memref<1x128xf32, #tpu.memory_space<vmem>>, vector<1x128xf32>
    %cst_16 = arith.constant dense<0.000000e+00> : vector<8x128xf32>
    %18 = tpu.matmul %15, %16, %cst_16 {dimension_numbers = #tpu.dot_dimension_numbers<[1], [0], [0], [1], [0, 0, 1, 1], [], []>} : vector<8x128xf32>, vector<128x128xf32>, vector<8x128xf32> -> vector<8x128xf32>
    %19 = vector.broadcast %17 : vector<1x128xf32> to vector<8x128xf32>
    %20 = arith.addf %18, %19 : vector<8x128xf32>
    %cst_17 = arith.constant 0.000000e+00 : f32
    %21 = vector.broadcast %cst_17 : f32 to vector<8x128xf32>
    %22 = arith.maximumf %20, %21 : vector<8x128xf32>
    %c0_18 = arith.constant 0 : index
    %c0_19 = arith.constant 0 : index
    %23 = vector.load %arg8[%c0_18, %c0_19] : memref<8x128xf32, #tpu.memory_space<vmem>>, vector<8x128xf32>
    tpu.vector_store %arg8[%c0_18, %c0_19], %22 {strides = array<i32>} : memref<8x128xf32, #tpu.memory_space<vmem>>, vector<8x128xf32>,
    return
  }
  func.func @transform_0(%arg0: i32) -> (i32, i32) {
    %c0_i32 = arith.constant 0 : i32
    %c0_i32_0 = arith.constant 0 : i32
    return %arg0, %c0_i32 : i32, i32
  }
  func.func @transform_1(%arg0: i32) -> (i32, i32) {
    %c0_i32 = arith.constant 0 : i32
    %c0_i32_0 = arith.constant 0 : i32
    %c0_i32_1 = arith.constant 0 : i32
    return %c0_i32, %c0_i32_0 : i32, i32
  }
  func.func @transform_2(%arg0: i32) -> (i32, i32) {
    %c0_i32 = arith.constant 0 : i32
    %c0_i32_0 = arith.constant 0 : i32
    %c0_i32_1 = arith.constant 0 : i32
    return %c0_i32, %c0_i32_0 : i32, i32
  }
  func.func @transform_3(%arg0: i32) -> (i32, i32) {
    %c0_i32 = arith.constant 0 : i32
    %c0_i32_0 = arith.constant 0 : i32
    %c0_i32_1 = arith.constant 0 : i32
    return %c0_i32, %c0_i32_0 : i32, i32
  }
  func.func @transform_4(%arg0: i32) -> (i32, i32) {
    %c0_i32 = arith.constant 0 : i32
    %c0_i32_0 = arith.constant 0 : i32
    %c0_i32_1 = arith.constant 0 : i32
    return %c0_i32, %c0_i32_0 : i32, i32
  }
  func.func @transform_5(%arg0: i32) -> (i32, i32) {
    %c0_i32 = arith.constant 0 : i32
    %c0_i32_0 = arith.constant 0 : i32
    %c0_i32_1 = arith.constant 0 : i32
    return %c0_i32, %c0_i32_0 : i32, i32
  }
  func.func @transform_6(%arg0: i32) -> (i32, i32) {
    %c0_i32 = arith.constant 0 : i32
    %c0_i32_0 = arith.constant 0 : i32
    %c0_i32_1 = arith.constant 0 : i32
    return %c0_i32, %c0_i32_0 : i32, i32
  }
  func.func @transform_7(%arg0: i32) -> (i32, i32) {
    %c0_i32 = arith.constant 0 : i32
    %c0_i32_0 = arith.constant 0 : i32
    return %arg0, %c0_i32 : i32, i32
  }
}

</mosaic_0001>

<llo_original>
// kernel: tpu_custom_call.1
$region0: #{tpu_custom_call.1}
  #allocation0 [shape = 'u32[]', space=smem, size = 0x4, offset = 0x4, fixed_abs, tag = 'smem constant byte address 0x4 - core index']
  #allocation1 [shape = 'u32[144,128]{1,0:T(1,128)}', space=vmem, size = 0x12000, scoped, tag = 'internal scratch']
  %s0 = inlined_call_operand.hbm [shape: f32[8,128], index: 0, kind: input, shape index: {}]
  %s1 = inlined_call_operand.hbm [shape: f32[128,128], index: 1, kind: input, shape index: {}]
  %s2 = inlined_call_operand.vmem [shape: f32[1,128], index: 2, kind: input, shape index: {}]
  %s3 = inlined_call_operand.hbm [shape: f32[128,128], index: 3, kind: input, shape index: {}]
  %s4 = inlined_call_operand.vmem [shape: f32[1,128], index: 4, kind: input, shape index: {}]
  %s5 = inlined_call_operand.hbm [shape: f32[128,128], index: 5, kind: input, shape index: {}]
  %s6 = inlined_call_operand.vmem [shape: f32[1,128], index: 6, kind: input, shape index: {}]
  %s7 = inlined_call_operand.hbm [shape: f32[8,128], index: 7, kind: output, shape index: {}]
  %s8 = sld [smem:[#allocation0]]
  $region54: #{tpu_custom_call.1} parent=0
    _
  %s10 = ssub.s32 1, %s8
  %s11 = scalar_select 0, %s10, %s8
  $region1: #{tpu_custom_call.1} parent=0
    #allocation2 [shape = 'u8[4096]{0}', space=vmem, size = 0x1000, scoped, tag = 'input window, operand 0, single buffered']
    #allocation3 [shape = 's32[1]{0}', space=sflag, size = 0x4, scoped, tag = 'scoped memory for tpu_custom_call.1']
    #allocation4 [shape = 's32[1]{0}', space=sflag, size = 0x4, scoped, tag = 'scoped memory for tpu_custom_call.1']
    #allocation5 [shape = 'u8[65536]{0}', space=vmem, size = 0x10000, scoped, tag = 'input window, operand 1, single buffered']
    #allocation6 [shape = 's32[1]{0}', space=sflag, size = 0x4, scoped, tag = 'scoped memory for tpu_custom_call.1']
    #allocation7 [shape = 'u8[65536]{0}', space=vmem, size = 0x10000, scoped, tag = 'input window, operand 3, single buffered']
    #allocation8 [shape = 'u8[65536]{0}', space=vmem, size = 0x10000, scoped, tag = 'input window, operand 5, single buffered']
    #allocation9 [shape = 's32[1]{0}', space=sflag, size = 0x4, scoped, tag = 'scoped memory for tpu_custom_call.1']
    #allocation10 [shape = 'u8[4096]{0}', space=vmem, size = 0x1000, scoped, tag = 'output window, operand 0, single buffered']
    %12 = vsyncpa [#allocation3], 0
    %13 = vsyncpa [#allocation6], 0
    %14 = vsyncpa [#allocation9], 0
    %15 = vsyncpa [#allocation4], 0
    // Predicated region
    $region2: #{tpu_custom_call.1} parent=1 // pred_check
      _
    $region3: #{tpu_custom_call.1} parent=1 // pred_check_branch
      %17 = sbr.rel (0) target = $region5
    $region4: #{tpu_custom_call.1} parent=1 // pred_region
      %s19 = ssub.s32 128, 128
      %20 = vsyncadd [#allocation3], %s19
      %s22 = sshll.u32 [#allocation2], 4
      %s23 = int_to_ptr.vmem [resolvable:$true] %s22
      %25 = dma.hbm_to_vmem [thread:$0]  %s0, 128, %s23, [#allocation3]
    $region5: #{tpu_custom_call.1} parent=1 // pred_fallthru
      _
    // Predicated region
    $region6: #{tpu_custom_call.1} parent=1 // pred_check
      _
    $region7: #{tpu_custom_call.1} parent=1 // pred_check_branch
      %27 = sbr.rel (0) target = $region9
    $region8: #{tpu_custom_call.1} parent=1 // pred_region
      %s29 = ssub.s32 2048, 2048
      %30 = vsyncadd [#allocation6], %s29
      %s31 = sshll.u32 [#allocation5], 4
      %s32 = int_to_ptr.vmem [resolvable:$true] %s31
      %37 = dma.hbm_to_vmem [thread:$0]  %s1, 2048, %s32, [#allocation6], 128, 128, 8
    $region9: #{tpu_custom_call.1} parent=1 // pred_fallthru
      _
    // Predicated region
    $region10: #{tpu_custom_call.1} parent=1 // pred_check
      _
    $region11: #{tpu_custom_call.1} parent=1 // pred_check_branch
      %39 = sbr.rel (0) target = $region13
    $region12: #{tpu_custom_call.1} parent=1 // pred_region
      _
    $region13: #{tpu_custom_call.1} parent=1 // pred_fallthru
      _
    // Predicated region
    $region14: #{tpu_custom_call.1} parent=1 // pred_check
      _
    $region15: #{tpu_custom_call.1} parent=1 // pred_check_branch
      %41 = sbr.rel (0) target = $region17
    $region16: #{tpu_custom_call.1} parent=1 // pred_region
      %s43 = ssub.s32 2048, 2048
      %44 = vsyncadd [#allocation6], %s43
      %s45 = sshll.u32 [#allocation7], 4
      %s46 = int_to_ptr.vmem [resolvable:$true] %s45
      %51 = dma.hbm_to_vmem [thread:$0]  %s3, 2048, %s46, [#allocation6], 128, 128, 8
    $region17: #{tpu_custom_call.1} parent=1 // pred_fallthru
      _
    // Predicated region
    $region18: #{tpu_custom_call.1} parent=1 // pred_check
      _
    $region19: #{tpu_custom_call.1} parent=1 // pred_check_branch
      %53 = sbr.rel (0) target = $region21
    $region20: #{tpu_custom_call.1} parent=1 // pred_region
      _
    $region21: #{tpu_custom_call.1} parent=1 // pred_fallthru
      _
    // Predicated region
    $region22: #{tpu_custom_call.1} parent=1 // pred_check
      _
    $region23: #{tpu_custom_call.1} parent=1 // pred_check_branch
      %55 = sbr.rel (0) target = $region25
    $region24: #{tpu_custom_call.1} parent=1 // pred_region
      %s57 = ssub.s32 2048, 2048
      %58 = vsyncadd [#allocation9], %s57
      %s59 = sshll.u32 [#allocation8], 4
      %s60 = int_to_ptr.vmem [resolvable:$true] %s59
      %65 = dma.hbm_to_vmem [thread:$0]  %s5, 2048, %s60, [#allocation9], 128, 128, 8
    $region25: #{tpu_custom_call.1} parent=1 // pred_fallthru
      _
    // Predicated region
    $region26: #{tpu_custom_call.1} parent=1 // pred_check
      _
    $region27: #{tpu_custom_call.1} parent=1 // pred_check_branch
      %67 = sbr.rel (0) target = $region29
    $region28: #{tpu_custom_call.1} parent=1 // pred_region
      _
    $region29: #{tpu_custom_call.1} parent=1 // pred_fallthru
      _
    // Predicated region
    $region30: #{tpu_custom_call.1} parent=1 // pred_check
      _
    $region31: #{tpu_custom_call.1} parent=1 // pred_check_branch
      %69 = sbr.rel (0) target = $region33
    $region32: #{tpu_custom_call.1} parent=1 // pred_region
      %70 = dma.done [#allocation3], 128
    $region33: #{tpu_custom_call.1} parent=1 // pred_fallthru
      _
    // Predicated region
    $region34: #{tpu_custom_call.1} parent=1 // pred_check
      _
    $region35: #{tpu_custom_call.1} parent=1 // pred_check_branch
      %72 = sbr.rel (0) target = $region37
    $region36: #{tpu_custom_call.1} parent=1 // pred_region
      %73 = dma.done [#allocation6], 2048
    $region37: #{tpu_custom_call.1} parent=1 // pred_fallthru
      _
    // Predicated region
    $region38: #{tpu_custom_call.1} parent=1 // pred_check
      _
    $region39: #{tpu_custom_call.1} parent=1 // pred_check_branch
      %75 = sbr.rel (0) target = $region41
    $region40: #{tpu_custom_call.1} parent=1 // pred_region
      %76 = dma.done [#allocation6], 2048
    $region41: #{tpu_custom_call.1} parent=1 // pred_fallthru
      _
    // Predicated region
    $region42: #{tpu_custom_call.1} parent=1 // pred_check
      _
    $region43: #{tpu_custom_call.1} parent=1 // pred_check_branch
      %78 = sbr.rel (0) target = $region45
    $region44: #{tpu_custom_call.1} parent=1 // pred_region
      %79 = dma.done [#allocation9], 2048
    $region45: #{tpu_custom_call.1} parent=1 // pred_fallthru
      _
    %v80 = vld [vmem:[#allocation2] sm:$0xff]
    %v81 = vld [vmem:[#allocation5] sm:$0xff]
    %v82 = vld [vmem:[#allocation5 + $0x8] sm:$0xff]
    %v83 = vld [vmem:[#allocation5 + $0x10] sm:$0xff]
    %v84 = vld [vmem:[#allocation5 + $0x18] sm:$0xff]
    %v85 = vld [vmem:[#allocation5 + $0x20] sm:$0xff]
    %v86 = vld [vmem:[#allocation5 + $0x28] sm:$0xff]
    %v87 = vld [vmem:[#allocation5 + $0x30] sm:$0xff]
    %v88 = vld [vmem:[#allocation5 + $0x38] sm:$0xff]
    %v89 = vld [vmem:[#allocation5 + $0x40] sm:$0xff]
    %v90 = vld [vmem:[#allocation5 + $0x48] sm:$0xff]
    %v91 = vld [vmem:[#allocation5 + $0x50] sm:$0xff]
    %v92 = vld [vmem:[#allocation5 + $0x58] sm:$0xff]
    %v93 = vld [vmem:[#allocation5 + $0x60] sm:$0xff]
    %v94 = vld [vmem:[#allocation5 + $0x68] sm:$0xff]
    %v95 = vld [vmem:[#allocation5 + $0x70] sm:$0xff]
    %v96 = vld [vmem:[#allocation5 + $0x78] sm:$0xff]
    %v97 = vld [vmem:[%s2] sm:$0x1]
    %v99 = vlaneseq
    %v100 = vshrl.u32 %v99, 7
    %v101 = vsub.s32 0, %v100
    %v102 = vrot.slane %v97, %v101
    %104 = vmatprep.subr.mxu0 0.0
    %105 = vmatpush1.msra.mxu0 %v96
    %106 = vmatprep.subr.mxu0 0.0
    %107 = vmatpush1.msra.mxu0 %v95
    %108 = vmatprep.subr.mxu0 0.0
    %109 = vmatpush1.msra.mxu0 %v94
    %110 = vmatprep.subr.mxu0 0.0
    %111 = vmatpush1.msra.mxu0 %v93
    %112 = vmatprep.subr.mxu0 0.0
    %113 = vmatpush1.msra.mxu0 %v92
    %114 = vmatprep.subr.mxu0 0.0
    %115 = vmatpush1.msra.mxu0 %v91
    %116 = vmatprep.subr.mxu0 0.0
    %117 = vmatpush1.msra.mxu0 %v90
    %118 = vmatprep.subr.mxu0 0.0
    %119 = vmatpush1.msra.mxu0 %v89
    %120 = vmatprep.subr.mxu0 0.0
    %121 = vmatpush1.msra.mxu0 %v88
    %122 = vmatprep.subr.mxu0 0.0
    %123 = vmatpush1.msra.mxu0 %v87
    %124 = vmatprep.subr.mxu0 0.0
    %125 = vmatpush1.msra.mxu0 %v86
    %126 = vmatprep.subr.mxu0 0.0
    %127 = vmatpush1.msra.mxu0 %v85
    %128 = vmatprep.subr.mxu0 0.0
    %129 = vmatpush1.msra.mxu0 %v84
    %130 = vmatprep.subr.mxu0 0.0
    %131 = vmatpush1.msra.mxu0 %v83
    %132 = vmatprep.subr.mxu0 0.0
    %133 = vmatpush1.msra.mxu0 %v82
    %134 = vmatprep.subr.mxu0 0.0
    %135 = vmatpush1.msra.mxu0 %v81
    %136 = vmatprep.subr.mxu0 0.0
    %137 = vmatpush2.msra.mxu0 0.0
    %138 = vmatprep.subr.mxu0 0.0
    %139 = vmatpush2.msra.mxu0 0.0
    %140 = vmatprep.subr.mxu0 0.0
    %141 = vmatpush2.msra.mxu0 0.0
    %142 = vmatprep.subr.mxu0 0.0
    %143 = vmatpush2.msra.mxu0 0.0
    %144 = vmatprep.subr.mxu0 0.0
    %145 = vmatpush2.msra.mxu0 0.0
    %146 = vmatprep.subr.mxu0 0.0
    %147 = vmatpush2.msra.mxu0 0.0
    %148 = vmatprep.subr.mxu0 0.0
    %149 = vmatpush2.msra.mxu0 0.0
    %150 = vmatprep.subr.mxu0 0.0
    %151 = vmatpush2.msra.mxu0 0.0
    %152 = vmatprep.subr.mxu0 0.0
    %153 = vmatpush2.msra.mxu0 0.0
    %154 = vmatprep.subr.mxu0 0.0
    %155 = vmatpush2.msra.mxu0 0.0
    %156 = vmatprep.subr.mxu0 0.0
    %157 = vmatpush2.msra.mxu0 0.0
    %158 = vmatprep.subr.mxu0 0.0
    %159 = vmatpush2.msra.mxu0 0.0
    %160 = vmatprep.subr.mxu0 0.0
    %161 = vmatpush2.msra.mxu0 0.0
    %162 = vmatprep.subr.mxu0 0.0
    %163 = vmatpush2.msra.mxu0 0.0
    %164 = vmatprep.subr.mxu0 0.0
    %165 = vmatpush2.msra.mxu0 0.0
    %166 = vmatprep.subr.mxu0 0.0
    %167 = vmatpush2.msra.mxu0 0.0
    %168 = vmatprep.mubr.f32.mxu0 0.0
    %169 = vmatmul.mubr.f32.gmra.mxu0 %v80
    %v170 = vpop.f32.mrf.mxu0
    %v171 = vadd.f32 %v102, %v170
    %v172 = vpop.f32.mrf.mxu0
    %173 = vdwg.mxu0
    %v174 = vmax.f32 %v171, 0.0
    %v175 = vld [vmem:[#allocation7] sm:$0xff]
    %v176 = vld [vmem:[#allocation7 + $0x8] sm:$0xff]
    %v177 = vld [vmem:[#allocation7 + $0x10] sm:$0xff]
    %v178 = vld [vmem:[#allocation7 + $0x18] sm:$0xff]
    %v179 = vld [vmem:[#allocation7 + $0x20] sm:$0xff]
    %v180 = vld [vmem:[#allocation7 + $0x28] sm:$0xff]
    %v181 = vld [vmem:[#allocation7 + $0x30] sm:$0xff]
    %v182 = vld [vmem:[#allocation7 + $0x38] sm:$0xff]
    %v183 = vld [vmem:[#allocation7 + $0x40] sm:$0xff]
    %v184 = vld [vmem:[#allocation7 + $0x48] sm:$0xff]
    %v185 = vld [vmem:[#allocation7 + $0x50] sm:$0xff]
    %v186 = vld [vmem:[#allocation7 + $0x58] sm:$0xff]
    %v187 = vld [vmem:[#allocation7 + $0x60] sm:$0xff]
    %v188 = vld [vmem:[#allocation7 + $0x68] sm:$0xff]
    %v189 = vld [vmem:[#allocation7 + $0x70] sm:$0xff]
    %v190 = vld [vmem:[#allocation7 + $0x78] sm:$0xff]
    %v191 = vld [vmem:[%s4] sm:$0x1]
    %v193 = vlaneseq
    %v194 = vshrl.u32 %v193, 7
    %v195 = vsub.s32 0, %v194
    %v196 = vrot.slane %v191, %v195
    %198 = vmatprep.subr.mxu0 0.0
    %199 = vmatpush1.msra.mxu0 %v190
    %200 = vmatprep.subr.mxu0 0.0
    %201 = vmatpush1.msra.mxu0 %v189
    %202 = vmatprep.subr.mxu0 0.0
    %203 = vmatpush1.msra.mxu0 %v188
    %204 = vmatprep.subr.mxu0 0.0
    %205 = vmatpush1.msra.mxu0 %v187
    %206 = vmatprep.subr.mxu0 0.0
    %207 = vmatpush1.msra.mxu0 %v186
    %208 = vmatprep.subr.mxu0 0.0
    %209 = vmatpush1.msra.mxu0 %v185
    %210 = vmatprep.subr.mxu0 0.0
    %211 = vmatpush1.msra.mxu0 %v184
    %212 = vmatprep.subr.mxu0 0.0
    %213 = vmatpush1.msra.mxu0 %v183
    %214 = vmatprep.subr.mxu0 0.0
    %215 = vmatpush1.msra.mxu0 %v182
    %216 = vmatprep.subr.mxu0 0.0
    %217 = vmatpush1.msra.mxu0 %v181
    %218 = vmatprep.subr.mxu0 0.0
    %219 = vmatpush1.msra.mxu0 %v180
    %220 = vmatprep.subr.mxu0 0.0
    %221 = vmatpush1.msra.mxu0 %v179
    %222 = vmatprep.subr.mxu0 0.0
    %223 = vmatpush1.msra.mxu0 %v178
    %224 = vmatprep.subr.mxu0 0.0
    %225 = vmatpush1.msra.mxu0 %v177
    %226 = vmatprep.subr.mxu0 0.0
    %227 = vmatpush1.msra.mxu0 %v176
    %228 = vmatprep.subr.mxu0 0.0
    %229 = vmatpush1.msra.mxu0 %v175
    %230 = vmatprep.subr.mxu0 0.0
    %231 = vmatpush2.msra.mxu0 0.0
    %232 = vmatprep.subr.mxu0 0.0
    %233 = vmatpush2.msra.mxu0 0.0
    %234 = vmatprep.subr.mxu0 0.0
    %235 = vmatpush2.msra.mxu0 0.0
    %236 = vmatprep.subr.mxu0 0.0
    %237 = vmatpush2.msra.mxu0 0.0
    %238 = vmatprep.subr.mxu0 0.0
    %239 = vmatpush2.msra.mxu0 0.0
    %240 = vmatprep.subr.mxu0 0.0
    %241 = vmatpush2.msra.mxu0 0.0
    %242 = vmatprep.subr.mxu0 0.0
    %243 = vmatpush2.msra.mxu0 0.0
    %244 = vmatprep.subr.mxu0 0.0
    %245 = vmatpush2.msra.mxu0 0.0
    %246 = vmatprep.subr.mxu0 0.0
    %247 = vmatpush2.msra.mxu0 0.0
    %248 = vmatprep.subr.mxu0 0.0
    %249 = vmatpush2.msra.mxu0 0.0
    %250 = vmatprep.subr.mxu0 0.0
    %251 = vmatpush2.msra.mxu0 0.0
    %252 = vmatprep.subr.mxu0 0.0
    %253 = vmatpush2.msra.mxu0 0.0
    %254 = vmatprep.subr.mxu0 0.0
    %255 = vmatpush2.msra.mxu0 0.0
    %256 = vmatprep.subr.mxu0 0.0
    %257 = vmatpush2.msra.mxu0 0.0
    %258 = vmatprep.subr.mxu0 0.0
    %259 = vmatpush2.msra.mxu0 0.0
    %260 = vmatprep.subr.mxu0 0.0
    %261 = vmatpush2.msra.mxu0 0.0
    %262 = vmatprep.mubr.f32.mxu0 0.0
    %263 = vmatmul.mubr.f32.gmra.mxu0 %v174
    %v264 = vpop.f32.mrf.mxu0
    %v265 = vadd.f32 %v196, %v264
    %v266 = vpop.f32.mrf.mxu0
    %267 = vdwg.mxu0
    %v268 = vmax.f32 %v265, 0.0
    %v269 = vadd.f32 %v268, %v174
    %v270 = vld [vmem:[#allocation8] sm:$0xff]
    %v271 = vld [vmem:[#allocation8 + $0x8] sm:$0xff]
    %v272 = vld [vmem:[#allocation8 + $0x10] sm:$0xff]
    %v273 = vld [vmem:[#allocation8 + $0x18] sm:$0xff]
    %v274 = vld [vmem:[#allocation8 + $0x20] sm:$0xff]
    %v275 = vld [vmem:[#allocation8 + $0x28] sm:$0xff]
    %v276 = vld [vmem:[#allocation8 + $0x30] sm:$0xff]
    %v277 = vld [vmem:[#allocation8 + $0x38] sm:$0xff]
    %v278 = vld [vmem:[#allocation8 + $0x40] sm:$0xff]
    %v279 = vld [vmem:[#allocation8 + $0x48] sm:$0xff]
    %v280 = vld [vmem:[#allocation8 + $0x50] sm:$0xff]
    %v281 = vld [vmem:[#allocation8 + $0x58] sm:$0xff]
    %v282 = vld [vmem:[#allocation8 + $0x60] sm:$0xff]
    %v283 = vld [vmem:[#allocation8 + $0x68] sm:$0xff]
    %v284 = vld [vmem:[#allocation8 + $0x70] sm:$0xff]
    %v285 = vld [vmem:[#allocation8 + $0x78] sm:$0xff]
    %v286 = vld [vmem:[%s6] sm:$0x1]
    %v288 = vlaneseq
    %v289 = vshrl.u32 %v288, 7
    %v290 = vsub.s32 0, %v289
    %v291 = vrot.slane %v286, %v290
    %293 = vmatprep.subr.mxu0 0.0
    %294 = vmatpush1.msra.mxu0 %v285
    %295 = vmatprep.subr.mxu0 0.0
    %296 = vmatpush1.msra.mxu0 %v284
    %297 = vmatprep.subr.mxu0 0.0
    %298 = vmatpush1.msra.mxu0 %v283
    %299 = vmatprep.subr.mxu0 0.0
    %300 = vmatpush1.msra.mxu0 %v282
    %301 = vmatprep.subr.mxu0 0.0
    %302 = vmatpush1.msra.mxu0 %v281
    %303 = vmatprep.subr.mxu0 0.0
    %304 = vmatpush1.msra.mxu0 %v280
    %305 = vmatprep.subr.mxu0 0.0
    %306 = vmatpush1.msra.mxu0 %v279
    %307 = vmatprep.subr.mxu0 0.0
    %308 = vmatpush1.msra.mxu0 %v278
    %309 = vmatprep.subr.mxu0 0.0
    %310 = vmatpush1.msra.mxu0 %v277
    %311 = vmatprep.subr.mxu0 0.0
    %312 = vmatpush1.msra.mxu0 %v276
    %313 = vmatprep.subr.mxu0 0.0
    %314 = vmatpush1.msra.mxu0 %v275
    %315 = vmatprep.subr.mxu0 0.0
    %316 = vmatpush1.msra.mxu0 %v274
    %317 = vmatprep.subr.mxu0 0.0
    %318 = vmatpush1.msra.mxu0 %v273
    %319 = vmatprep.subr.mxu0 0.0
    %320 = vmatpush1.msra.mxu0 %v272
    %321 = vmatprep.subr.mxu0 0.0
    %322 = vmatpush1.msra.mxu0 %v271
    %323 = vmatprep.subr.mxu0 0.0
    %324 = vmatpush1.msra.mxu0 %v270
    %325 = vmatprep.subr.mxu0 0.0
    %326 = vmatpush2.msra.mxu0 0.0
    %327 = vmatprep.subr.mxu0 0.0
    %328 = vmatpush2.msra.mxu0 0.0
    %329 = vmatprep.subr.mxu0 0.0
    %330 = vmatpush2.msra.mxu0 0.0
    %331 = vmatprep.subr.mxu0 0.0
    %332 = vmatpush2.msra.mxu0 0.0
    %333 = vmatprep.subr.mxu0 0.0
    %334 = vmatpush2.msra.mxu0 0.0
    %335 = vmatprep.subr.mxu0 0.0
    %336 = vmatpush2.msra.mxu0 0.0
    %337 = vmatprep.subr.mxu0 0.0
    %338 = vmatpush2.msra.mxu0 0.0
    %339 = vmatprep.subr.mxu0 0.0
    %340 = vmatpush2.msra.mxu0 0.0
    %341 = vmatprep.subr.mxu0 0.0
    %342 = vmatpush2.msra.mxu0 0.0
    %343 = vmatprep.subr.mxu0 0.0
    %344 = vmatpush2.msra.mxu0 0.0
    %345 = vmatprep.subr.mxu0 0.0
    %346 = vmatpush2.msra.mxu0 0.0
    %347 = vmatprep.subr.mxu0 0.0
    %348 = vmatpush2.msra.mxu0 0.0
    %349 = vmatprep.subr.mxu0 0.0
    %350 = vmatpush2.msra.mxu0 0.0
    %351 = vmatprep.subr.mxu0 0.0
    %352 = vmatpush2.msra.mxu0 0.0
    %353 = vmatprep.subr.mxu0 0.0
    %354 = vmatpush2.msra.mxu0 0.0
    %355 = vmatprep.subr.mxu0 0.0
    %356 = vmatpush2.msra.mxu0 0.0
    %357 = vmatprep.mubr.f32.mxu0 0.0
    %358 = vmatmul.mubr.f32.gmra.mxu0 %v269
    %v359 = vpop.f32.mrf.mxu0
    %v360 = vadd.f32 %v291, %v359
    %v361 = vpop.f32.mrf.mxu0
    %362 = vdwg.mxu0
    %v363 = vmax.f32 %v360, 0.0
    %364 = vst [vmem:[#allocation10] sm:$0xff] %v363
    // Predicated region
    $region46: #{tpu_custom_call.1} parent=1 // pred_check
      _
    $region47: #{tpu_custom_call.1} parent=1 // pred_check_branch
      %366 = sbr.rel (0) target = $region49
    $region48: #{tpu_custom_call.1} parent=1 // pred_region
      %s368 = ssub.s32 128, 128
      %369 = vsyncadd [#allocation4], %s368
      %s371 = sshll.u32 [#allocation10], 4
      %s372 = int_to_ptr.vmem [resolvable:$true] %s371
      %374 = dma.vmem_to_hbm [thread:$0]  %s372, 128, %s7, [#allocation4]
    $region49: #{tpu_custom_call.1} parent=1 // pred_fallthru
      _
    // Predicated region
    $region50: #{tpu_custom_call.1} parent=1 // pred_check
      _
    $region51: #{tpu_custom_call.1} parent=1 // pred_check_branch
      %376 = sbr.rel (0) target = $region53
    $region52: #{tpu_custom_call.1} parent=1 // pred_region
      %377 = dma.done [#allocation4], 128
    $region53: #{tpu_custom_call.1} parent=1 // pred_fallthru
      _
    %378 = vsyncpa [#allocation3], 1
    %379 = vsyncpa [#allocation6], 1
    %380 = vsyncpa [#allocation9], 1
    %381 = vsyncpa [#allocation4], 1

</llo_original>
